<compile_context>
chip_gen: v7x
topology: tpu7x:2x2x1
jax: 0.10.0
libtpu: 0.0.40
codegen_flags: <defaults>
</compile_context>

<pallas_src>
import functools

import numpy as np
import jax
import jax.numpy as jnp
from jax.experimental import pallas as pl
from jax.experimental.pallas import tpu as pltpu

LEAKY_SLOPE = 0.01   # nn.LeakyReLU default
IN_EPS = 1e-5        # nn.InstanceNorm2d default
LANE = 128


def _round_up(n, m):
    return ((n + m - 1) // m) * m


# --------------------------------------------------------------------------- #
# pltpu.roll wrap-direction probe (one tiny kernel, run once at import).       #
# The fused kernel only needs "shift columns so column m reads column m+d";   #
# the probe pins the sign convention so this holds on any jax version.        #
# --------------------------------------------------------------------------- #
def _detect_roll_is_jnp_like():
    def kernel(x_ref, o_ref):
        o_ref[...] = pltpu.roll(x_ref[...], shift=1, axis=1)

    x = jnp.tile(jnp.arange(128, dtype=jnp.float32)[None, :], (8, 1))
    out = pl.pallas_call(
        kernel, out_shape=jax.ShapeDtypeStruct((8, 128), jnp.float32))(x)
    # jnp.roll convention -> out[0,0] == 127 ; opposite convention -> 1.0
    return bool(float(out[0, 0]) != 1.0)


_ROLL_LIKE_JNP = _detect_roll_is_jnp_like()


# ------------------------- host-side plan helpers --------------------------- #

def _conv_out(h, w, stride, pad):
    return (h + 2 * pad - 3) // stride + 1, (w + 2 * pad - 3) // stride + 1


def _make_mask(h, w, pad):
    """(9, Mpad) f32; mask[t, m] = 1 iff tap t of a 3x3/pad-`pad` conv at flat
    position m reads an in-range pixel (0 for zero-padding taps / pad lanes)."""
    m = h * w
    mp = _round_up(m, LANE)
    out = np.zeros((9, mp), np.float32)
    idx = np.arange(m)
    ii, jj = idx // w, idx % w
    for t in range(9):
        dy, dx = t // 3 - pad, t % 3 - pad
        ok = (ii + dy >= 0) & (ii + dy < h) & (jj + dx >= 0) & (jj + dx < w)
        out[t, :m] = ok
    return out


def _make_sel(h, w, stride, pad):
    """(Mpad_in, Mpad_out) 0/1 f32 matrix picking the strided / valid output
    grid of a 3x3 conv (or 3x3 pool) out of the full input-resolution grid."""
    oh, ow = _conv_out(h, w, stride, pad)
    m_in, m_out = h * w, oh * ow
    sel = np.zeros((_round_up(m_in, LANE), _round_up(m_out, LANE)), np.float32)
    dst = np.arange(m_out)
    src = (stride * (dst // ow)) * w + stride * (dst % ow)
    sel[src, dst] = 1.0
    return sel


def _extract_patches(x, stride, padding):
    """JAX-side im2col for the *input layer only*. (B,C,H,W) -> (B,9C,OH*OW)."""
    B, C, H, W = x.shape
    if padding > 0:
        x = jnp.pad(x, ((0, 0), (0, 0), (padding, padding), (padding, padding)))
    Hp, Wp = H + 2 * padding, W + 2 * padding
    OH = (Hp - 3) // stride + 1
    OW = (Wp - 3) // stride + 1
    taps = []
    for kh in range(3):
        for kw in range(3):
            taps.append(x[:, :, kh:kh + stride * (OH - 1) + 1:stride,
                          kw:kw + stride * (OW - 1) + 1:stride])
    p = jnp.concatenate(taps, axis=1)                       # (B, 9C, OH, OW)
    return p.reshape(B, 9 * C, OH * OW), OH, OW


# --------------------------- fused forward pass ----------------------------- #

def resnet13_light_forward(x_nchw, params, down_pad=False):
    """ResNet13Light forward. x: (B,3,H,W) f32 NCHW -> (B,C,H',W') f32 NCHW."""
    dp = 1 if down_pad else 0
    B = x_nchw.shape[0]
    cin0 = params['conv1'][0].shape[2]
    C = params['conv1'][0].shape[-1]

    # Input layer: im2col in JAX (tiny), the matmul itself runs in the kernel.
    patches, h, w = _extract_patches(x_nchw.astype(jnp.float32), 2, dp)
    m0 = h * w
    m0p = _round_up(m0, LANE)
    patches = jnp.pad(patches, ((0, 0), (0, 0), (0, m0p - m0)))

    # Stacked weights / biases, resident in VMEM for the whole kernel.
    conv_names = ['b1c1', 'b1c2', 'b15c1', 'b15c2', 'b2c1', 'b2c2',
                  'b25c1', 'b25c2', 'b3c1', 'b3c2', 'b35c1', 'b35c2']
    w1t = jnp.transpose(params['conv1'][0].reshape(9 * cin0, C)).astype(jnp.float32)
    wstack = jnp.concatenate(
        [jnp.transpose(params[n][0], (0, 1, 3, 2)).reshape(9, C, C)
         for n in conv_names], axis=0).astype(jnp.float32)            # (108, C, C)
    bstack = jnp.stack(
        [params[n][1].reshape(C, 1) for n in ['conv1'] + conv_names]
    ).astype(jnp.float32)                                             # (13, C, 1)

    # ---- static plan: per-conv tap offsets, edge masks, selection matrices ----
    aux, aux_idx = [], {}

    def aux_const(key, build):
        if key not in aux_idx:
            aux_idx[key] = len(aux)
            aux.append(jnp.asarray(build()))
        return aux_idx[key]

    def layer_meta(hh, ww, stride, pad, li=None):
        oh, ow = _conv_out(hh, ww, stride, pad)
        meta = dict(
            w=ww, m_pad=_round_up(hh * ww, LANE),
            offsets=[(t // 3 - pad, t % 3 - pad) for t in range(9)],
            mask=(aux_const(('mask', hh, ww, pad), lambda: _make_mask(hh, ww, pad))
                  if pad > 0 else None),
            sel=(aux_const(('sel', hh, ww, stride, pad),
                           lambda: _make_sel(hh, ww, stride, pad))
                 if (oh, ow) != (hh, ww) else None),
            oh=oh, ow=ow)
        if li is not None:                       # conv layer (vs. avg-pool)
            meta['w_base'] = li * 9
            meta['b_idx'] = li + 1               # bias 0 belongs to conv1
        return meta

    blocks = [('strided', 2), ('plain', 1), ('strided', 2),
              ('plain', 1), ('strided', 1), ('plain', 1)]
    plan, li = [], 0
    for btype, bstride in blocks:
        m1 = layer_meta(h, w, 1, 1, li); li += 1
        if btype == 'plain':
            m2 = layer_meta(h, w, 1, 1, li); li += 1
            plan.append(('plain', m1, m2, None))
        else:
            m2 = layer_meta(h, w, bstride, dp, li); li += 1
            pm = layer_meta(h, w, bstride, dp)       # AvgPool2d(3, stride, dp)
            plan.append(('strided', m1, m2, pm))
            h, w = m2['oh'], m2['ow']
    fh, fw = h, w
    mf = fh * fw
    mfp = _round_up(mf, LANE)
    n_aux = len(aux)
    roll_like_jnp = _ROLL_LIKE_JNP

    # ------------------------------- the kernel ------------------------------ #
    def kernel(*refs):
        patches_ref, w1_ref, ws_ref, bs_ref = refs[:4]
        aux_refs = refs[4:4 + n_aux]
        out_ref = refs[4 + n_aux]

        def shift_cols(v, d, mp):
            # y[:, m] = v[:, (m + d) mod mp]   (static lane rotation, XLU slot)
            if d % mp == 0:
                return v
            sh = (-d) % mp if roll_like_jnp else d % mp
            return pltpu.roll(v, shift=sh, axis=1)

        def leaky(v):
            return jnp.where(v > 0, v, LEAKY_SLOPE * v)

        def taps_sum(v, meta, weighted):
            acc = None
            for t, (dy, dx) in enumerate(meta['offsets']):
                vt = shift_cols(v, dy * meta['w'] + dx, meta['m_pad'])
                if meta['mask'] is not None:
                    vt = vt * aux_refs[meta['mask']][t:t + 1, :]
                if weighted:
                    vt = jnp.dot(ws_ref[meta['w_base'] + t], vt,
                                 preferred_element_type=jnp.float32)
                acc = vt if acc is None else acc + vt
            if meta['sel'] is not None:
                acc = jnp.dot(acc, aux_refs[meta['sel']][...],
                              preferred_element_type=jnp.float32)
            return acc

        def conv(v, meta):
            return taps_sum(v, meta, weighted=True) + bs_ref[meta['b_idx']]

        def pool(v, meta):
            # AvgPool2d(3, stride, pad), count_include_pad=True
            return taps_sum(v, meta, weighted=False) * (1.0 / 9.0)

        # conv1 (im2col matmul), no activation.
        x = jnp.dot(w1_ref[...], patches_ref[...],
                    preferred_element_type=jnp.float32) + bs_ref[0]

        # six residual blocks, all activations resident in VMEM.
        for btype, m1, m2, pm in plan:
            hid = leaky(conv(x, m1))
            out = leaky(conv(hid, m2))
            x = out + (x if btype == 'plain' else pool(x, pm))

        # Final InstanceNorm2d (affine=False) over the *valid* spatial lanes.
        valid = x[:, :mf]
        mean = jnp.mean(valid, axis=1, keepdims=True)
        var = jnp.maximum(
            jnp.mean(valid * valid, axis=1, keepdims=True) - mean * mean, 0.0)
        out_ref[...] = ((x - mean) * jax.lax.rsqrt(var + IN_EPS)).astype(out_ref.dtype)

    # ------------------------------ pallas_call ------------------------------ #
    in_specs = [
        pl.BlockSpec((None, 9 * cin0, m0p), lambda i: (i, 0, 0)),  # per-image
        pl.BlockSpec(w1t.shape, lambda i: (0, 0)),                 # resident
        pl.BlockSpec(wstack.shape, lambda i: (0, 0, 0)),
        pl.BlockSpec(bstack.shape, lambda i: (0, 0, 0)),
    ]
    in_specs += [pl.BlockSpec(a.shape, lambda i: (0, 0)) for a in aux]

    out = pl.pallas_call(
        kernel,
        out_shape=jax.ShapeDtypeStruct((B, C, mfp), jnp.float32),
        grid=(B,),
        in_specs=in_specs,
        out_specs=pl.BlockSpec((None, C, mfp), lambda i: (i, 0, 0)),
        compiler_params=pltpu.CompilerParams(dimension_semantics=("parallel",)),
    )(patches, w1t, wstack, bstack, *aux)

    return out[:, :, :mf].reshape(B, C, fh, fw)


# --------------------------------- params ----------------------------------- #

def init_params(key, channels):
    """Deterministic kaiming-uniform-style init; biases zero (matches init_weights)."""
    def conv_init(k, cin, cout):
        fan_in = cin * 9
        bound = (6.0 / fan_in) ** 0.5
        wgt = jax.random.uniform(k, (3, 3, cin, cout), jnp.float32, -bound, bound)
        return wgt, jnp.zeros((cout,), jnp.float32)

    names = ['conv1',
             'b1c1', 'b1c2', 'b15c1', 'b15c2',
             'b2c1', 'b2c2', 'b25c1', 'b25c2',
             'b3c1', 'b3c2', 'b35c1', 'b35c2']   # 13 convs -> ResNet13
    keys = jax.random.split(key, len(names))
    params = {}
    for n, k in zip(names, keys):
        cin = 3 if n == 'conv1' else channels
        params[n] = conv_init(k, cin, channels)
    return params


if __name__ == "__main__":
    key = jax.random.PRNGKey(0)
    kx, kp = jax.random.split(key)

    B, C_IN, H, W = 2, 3, 64, 64     # 64 spatial so block3 (pad=0) stays valid
    CHANNELS = 8

    x = jax.random.normal(kx, (B, C_IN, H, W), jnp.float32)      # NCHW like PyTorch
    params = init_params(kp, CHANNELS)

    fwd = jax.jit(functools.partial(resnet13_light_forward, down_pad=False))
    out = jax.block_until_ready(fwd(x, params))

    assert out.shape == (B, CHANNELS, 5, 5), out.shape
    assert bool(jnp.all(jnp.isfinite(out)))
    print("KERNEL_OK")
</pallas_src>

<mosaic_0001>
module attributes {stable_mosaic.version = 11 : i64} {
  func.func @kernel(%arg0: memref<8x128xf32, #tpu.memory_space<vmem>>, %arg1: memref<8x128xf32, #tpu.memory_space<vmem>>) attributes {dimension_semantics = [], scalar_prefetch = 0 : i64, scratch_operands = 0 : i64, tpu.core_type = #tpu.core_type<tc>} {
    %c0 = arith.constant 0 : index
    %c0_0 = arith.constant 0 : index
    %0 = vector.load %arg0[%c0, %c0_0] : memref<8x128xf32, #tpu.memory_space<vmem>>, vector<8x128xf32>
    %c1_i32 = arith.constant 1 : i32
    %1 = tpu.dynamic_rotate %0 by %c1_i32 dim 1 : vector<8x128xf32>, i32 -> vector<8x128xf32>
    %c0_1 = arith.constant 0 : index
    %c0_2 = arith.constant 0 : index
    %2 = vector.load %arg1[%c0_1, %c0_2] : memref<8x128xf32, #tpu.memory_space<vmem>>, vector<8x128xf32>
    tpu.vector_store %arg1[%c0_1, %c0_2], %1 {strides = array<i32>} : memref<8x128xf32, #tpu.memory_space<vmem>>, vector<8x128xf32>,
    return
  }
}

</mosaic_0001>

<llo_original>
// kernel: tpu_custom_call.1
$region0: #{tpu_custom_call.1}
  #allocation0 [shape = 'u32[]', space=smem, size = 0x4, offset = 0x4, fixed_abs, tag = 'smem constant byte address 0x4 - core index']
  #allocation1 [shape = 'u32[144,128]{1,0:T(1,128)}', space=vmem, size = 0x12000, scoped, tag = 'internal scratch']
  %s0 = inlined_call_operand.hbm [shape: f32[8,128], index: 0, kind: input, shape index: {}]
  %s1 = inlined_call_operand.hbm [shape: f32[8,128], index: 1, kind: output, shape index: {}]
  %s2 = sld [smem:[#allocation0]]
  $region18: #{tpu_custom_call.1} parent=0
    _
  %s4 = ssub.s32 1, %s2
  %s5 = scalar_select 0, %s4, %s2
  $region1: #{tpu_custom_call.1} parent=0
    #allocation2 [shape = 'u8[4096]{0}', space=vmem, size = 0x1000, scoped, tag = 'input window, operand 0, single buffered']
    #allocation3 [shape = 's32[1]{0}', space=sflag, size = 0x4, scoped, tag = 'scoped memory for tpu_custom_call.1']
    #allocation4 [shape = 's32[1]{0}', space=sflag, size = 0x4, scoped, tag = 'scoped memory for tpu_custom_call.1']
    #allocation5 [shape = 'u8[4096]{0}', space=vmem, size = 0x1000, scoped, tag = 'output window, operand 0, single buffered']
    %6 = vsyncpa [#allocation3], 0
    %7 = vsyncpa [#allocation4], 0
    // Predicated region
    $region2: #{tpu_custom_call.1} parent=1 // pred_check
      _
    $region3: #{tpu_custom_call.1} parent=1 // pred_check_branch
      %9 = sbr.rel (0) target = $region5
    $region4: #{tpu_custom_call.1} parent=1 // pred_region
      %s11 = ssub.s32 128, 128
      %12 = vsyncadd [#allocation3], %s11
      %s14 = sshll.u32 [#allocation2], 4
      %s15 = int_to_ptr.vmem [resolvable:$true] %s14
      %17 = dma.hbm_to_vmem [thread:$0]  %s0, 128, %s15, [#allocation3]
    $region5: #{tpu_custom_call.1} parent=1 // pred_fallthru
      _
    // Predicated region
    $region6: #{tpu_custom_call.1} parent=1 // pred_check
      _
    $region7: #{tpu_custom_call.1} parent=1 // pred_check_branch
      %19 = sbr.rel (0) target = $region9
    $region8: #{tpu_custom_call.1} parent=1 // pred_region
      %20 = dma.done [#allocation3], 128
    $region9: #{tpu_custom_call.1} parent=1 // pred_fallthru
      _
    %v21 = vld [vmem:[#allocation2] sm:$0xff]
    %22 = vrot.lane.b32.xlu0 %v21, 1
    %v23 = vpop.permute.xlu0 %22
    %24 = vst [vmem:[#allocation5] sm:$0xff] %v23
    // Predicated region
    $region10: #{tpu_custom_call.1} parent=1 // pred_check
      _
    $region11: #{tpu_custom_call.1} parent=1 // pred_check_branch
      %26 = sbr.rel (0) target = $region13
    $region12: #{tpu_custom_call.1} parent=1 // pred_region
      %s28 = ssub.s32 128, 128
      %29 = vsyncadd [#allocation4], %s28
      %s31 = sshll.u32 [#allocation5], 4
      %s32 = int_to_ptr.vmem [resolvable:$true] %s31
      %34 = dma.vmem_to_hbm [thread:$0]  %s32, 128, %s1, [#allocation4]
    $region13: #{tpu_custom_call.1} parent=1 // pred_fallthru
      _
    // Predicated region
    $region14: #{tpu_custom_call.1} parent=1 // pred_check
      _
    $region15: #{tpu_custom_call.1} parent=1 // pred_check_branch
      %36 = sbr.rel (0) target = $region17
    $region16: #{tpu_custom_call.1} parent=1 // pred_region
      %37 = dma.done [#allocation4], 128
    $region17: #{tpu_custom_call.1} parent=1 // pred_fallthru
      _
    %38 = vsyncpa [#allocation3], 1
    %39 = vsyncpa [#allocation4], 1

</llo_original>
